<compile_context>
chip_gen: v6e
topology: v6e:2x2x1
jax: 0.10.0
libtpu: 0.0.40
codegen_flags: <defaults>
</compile_context>

<pallas_src>
import functools

import jax
import jax.numpy as jnp
from jax.experimental import pallas as pl
from jax.experimental.pallas import tpu as pltpu


def _round_up(n, m):
    return ((n + m - 1) // m) * m


def local_head_kernel(x_ref, w_ref, b_ref, o_ref, acc_ref, *,
                      x_min, x_max, num_bins):
    """Grid = (B tiles [parallel], I tiles [arbitrary/reduction])."""
    k_step = pl.program_id(1)

    @pl.when(k_step == 0)
    def _():
        acc_ref[...] = jnp.zeros_like(acc_ref)

    # (TB, TI) @ (TI, O_pad) on the MXU, accumulate in f32.
    acc_ref[...] += jnp.dot(x_ref[...], w_ref[...],
                            preferred_element_type=jnp.float32)

    @pl.when(k_step == pl.num_programs(1) - 1)
    def _():
        v = acc_ref[...] + b_ref[...].astype(jnp.float32)   # (TB, O_pad)
        v = jnp.clip(v, x_min, x_max)                        # hardtanh

        # Uniform-bin closed form: only the bin containing v contributes.
        bin_w = (x_max - x_min) / num_bins                   # python float
        inv_w = 1.0 / bin_w
        norm = 4.0 * inv_w * inv_w                           # 4 / (R-L)^2
        k = jnp.clip(jnp.floor((v - x_min) * inv_w), 0.0, num_bins - 1.0)
        left = x_min + k * bin_w
        right = left + bin_w
        phi = (jnp.maximum(v - left, 0.0)
               * jnp.maximum(right - v, 0.0) * norm)         # (TB, O_pad)
        o_ref[...] = (phi * phi).astype(o_ref.dtype)


def prepare_local_head_params(weight, bias, lane=128):
    """One-time parameter prep (NOT in the forward hot path).

    weight: torch-style (out_features, in_features); bias: (out_features,).
    Returns W^T zero-padded to (in_features, O_pad) and bias as (1, O_pad).
    """
    out_features, in_features = weight.shape
    o_pad = _round_up(out_features, lane)
    w_t = jnp.zeros((in_features, o_pad), weight.dtype).at[:, :out_features].set(weight.T)
    b = jnp.zeros((1, o_pad), bias.dtype).at[0, :out_features].set(bias)
    return w_t, b


def local_head_forward(x, w_t_pad, b_pad, out_features, num_bins=None,
                       x_min=-1.0, x_max=1.0, *, block_b=256, block_i=512):
    """x: (B, in_features); w_t_pad: (in_features, O_pad); b_pad: (1, O_pad)."""
    if num_bins is None:
        num_bins = out_features
    B, I = x.shape
    I_w, O_pad = w_t_pad.shape
    assert I == I_w, "x / weight in_features mismatch"

    # --- B (batch) tiling: parallel axis (pipelined, megacore-shardable) ---
    if B <= block_b:
        tb, B_pad = B, B                      # full dim -> no (8,) constraint
    else:
        tb = block_b                          # multiple of 8
        B_pad = _round_up(B, tb)

    # --- I (contraction) tiling: reduction axis with f32 accumulator ---
    if I <= 2 * block_i:
        ti, I_pad = I, I                      # full dim block
    else:
        ti = block_i                          # multiple of 128
        I_pad = _round_up(I, ti)

    x_p = x
    if B_pad != B or I_pad != I:
        x_p = jnp.zeros((B_pad, I_pad), x.dtype).at[:B, :I].set(x)
    w_p = w_t_pad
    if I_pad != I:
        w_p = jnp.zeros((I_pad, O_pad), w_t_pad.dtype).at[:I, :].set(w_t_pad)

    nb = B_pad // tb
    nk = I_pad // ti
    out_dtype = jnp.result_type(x.dtype, w_t_pad.dtype)

    kernel = functools.partial(local_head_kernel,
                               x_min=float(x_min), x_max=float(x_max),
                               num_bins=int(num_bins))

    out = pl.pallas_call(
        kernel,
        out_shape=jax.ShapeDtypeStruct((B_pad, O_pad), out_dtype),
        grid=(nb, nk),
        in_specs=[
            pl.BlockSpec((tb, ti), lambda i, k: (i, k)),        # x tile
            pl.BlockSpec((ti, O_pad), lambda i, k: (k, 0)),     # W^T tile
            pl.BlockSpec((1, O_pad), lambda i, k: (0, 0)),      # bias (resident)
        ],
        out_specs=pl.BlockSpec((tb, O_pad), lambda i, k: (i, 0)),
        scratch_shapes=[pltpu.VMEM((tb, O_pad), jnp.float32)],  # f32 accumulator
        compiler_params=pltpu.CompilerParams(
            dimension_semantics=("parallel", "arbitrary")),
    )(x_p, w_p, b_pad)

    return out[:B, :out_features]


def local_head_reference(x, weight, bias, left_bounds, right_bounds,
                         x_min=-1.0, x_max=1.0):
    """Pure-JAX reference mirroring the PyTorch forward (general bounds)."""
    v = jnp.dot(x, weight.T, precision=jax.lax.Precision.HIGHEST) + bias
    v = jnp.clip(v, x_min, x_max)                         # hardtanh
    v = v[:, :, None]                                     # unsqueeze(2) + repeat
    norm_const = 4.0 / (right_bounds - left_bounds) ** 2
    v = (jnp.maximum(v - left_bounds, 0.0)
         * jnp.maximum(right_bounds - v, 0.0) * norm_const)
    v = v * v
    return v.sum(axis=2)


def _make_module_params(key, in_features, out_features, x_min, x_max):
    k_w, k_b = jax.random.split(key, 2)
    bound = 1.0 / (in_features ** 0.5)
    weight = jax.random.uniform(k_w, (out_features, in_features),
                                minval=-bound, maxval=bound, dtype=jnp.float32)
    bias = jax.random.uniform(k_b, (out_features,),
                              minval=-bound, maxval=bound, dtype=jnp.float32)
    domain = jnp.linspace(x_min, x_max, out_features + 1, dtype=jnp.float32)
    left_bounds = jnp.tile(domain[:-1][None, :], (out_features, 1))   # (O, O)
    right_bounds = jnp.tile(domain[1:][None, :], (out_features, 1))   # (O, O)
    return weight, bias, left_bounds, right_bounds


if __name__ == "__main__":
    x_min, x_max = -1.0, 1.0
    key = jax.random.PRNGKey(0)
    k1, k2, k3, k4 = jax.random.split(key, 4)

    # ---- test 1: small shapes consistent with LocalHead(32, 16) ----
    B, in_features, out_features = 8, 32, 16
    x = jax.random.normal(k1, (B, in_features), dtype=jnp.float32)
    weight, bias, lb, rb = _make_module_params(k2, in_features, out_features,
                                               x_min, x_max)
    w_t_pad, b_pad = prepare_local_head_params(weight, bias)   # one-time prep
    out = local_head_forward(x, w_t_pad, b_pad, out_features,
                             num_bins=out_features, x_min=x_min, x_max=x_max)
    out = jax.block_until_ready(out)
    ref = local_head_reference(x, weight, bias, lb, rb, x_min=x_min, x_max=x_max)
    assert out.shape == (B, out_features)
    assert jnp.allclose(out, ref, atol=1e-5, rtol=1e-5), "mismatch vs reference (small)"

    # ---- test 2: exercises the tiled path (B > 256, in_features > 1024) ----
    B2, in2, out2 = 300, 1100, 16
    x2 = jax.random.normal(k3, (B2, in2), dtype=jnp.float32)
    weight2, bias2, lb2, rb2 = _make_module_params(k4, in2, out2, x_min, x_max)
    w_t_pad2, b_pad2 = prepare_local_head_params(weight2, bias2)
    out2_v = local_head_forward(x2, w_t_pad2, b_pad2, out2,
                                num_bins=out2, x_min=x_min, x_max=x_max)
    out2_v = jax.block_until_ready(out2_v)
    ref2 = local_head_reference(x2, weight2, bias2, lb2, rb2,
                                x_min=x_min, x_max=x_max)
    assert out2_v.shape == (B2, out2)
    assert jnp.allclose(out2_v, ref2, atol=1e-4, rtol=1e-4), "mismatch vs reference (tiled)"

    print("KERNEL_OK")
</pallas_src>

<mosaic_0001>
module attributes {stable_mosaic.version = 11 : i64} {
  func.func @local_head_kernel(%arg0: i32, %arg1: i32, %arg2: memref<8x32xf32, #tpu.memory_space<vmem>>, %arg3: memref<32x128xf32, #tpu.memory_space<vmem>>, %arg4: memref<1x128xf32, #tpu.memory_space<vmem>>, %arg5: memref<8x128xf32, #tpu.memory_space<vmem>>, %arg6: memref<8x128xf32, #tpu.memory_space<vmem>>) attributes {dimension_semantics = [#tpu.dimension_semantics<parallel>, #tpu.dimension_semantics<arbitrary>], iteration_bounds = array<i64: 1, 1>, scalar_prefetch = 0 : i64, scratch_operands = 1 : i64, tpu.core_type = #tpu.core_type<tc>, window_params = [{transform_indices = @transform_0, window_bounds = array<i64: 8, 32>}, {transform_indices = @transform_1, window_bounds = array<i64: 32, 128>}, {pipeline_mode = #tpu.pipeline_mode<synchronous>, transform_indices = @transform_2, window_bounds = array<i64: 1, 128>}, {transform_indices = @transform_3, window_bounds = array<i64: 8, 128>}]} {
    %c0_i32 = arith.constant 0 : i32
    %0 = arith.cmpi eq, %arg1, %c0_i32 : i32
    %1 = arith.extui %0 : i1 to i32
    %c0_i32_0 = arith.constant 0 : i32
    %2 = arith.cmpi ne, %1, %c0_i32_0 : i32
    scf.if %2 {
      %cst_10 = arith.constant 0.000000e+00 : f32
      %12 = vector.broadcast %cst_10 : f32 to vector<8x128xf32>
      %c0_11 = arith.constant 0 : index
      %c0_12 = arith.constant 0 : index
      %13 = vector.load %arg6[%c0_11, %c0_12] : memref<8x128xf32, #tpu.memory_space<vmem>>, vector<8x128xf32>
      tpu.vector_store %arg6[%c0_11, %c0_12], %12 {strides = array<i32>} : memref<8x128xf32, #tpu.memory_space<vmem>>, vector<8x128xf32>,
    } else {
    }
    %c0 = arith.constant 0 : index
    %c0_1 = arith.constant 0 : index
    %3 = vector.load %arg6[%c0, %c0_1] : memref<8x128xf32, #tpu.memory_space<vmem>>, vector<8x128xf32>
    %c0_2 = arith.constant 0 : index
    %c0_3 = arith.constant 0 : index
    %4 = vector.load %arg2[%c0_2, %c0_3] : memref<8x32xf32, #tpu.memory_space<vmem>>, vector<8x32xf32>
    %c0_4 = arith.constant 0 : index
    %c0_5 = arith.constant 0 : index
    %5 = vector.load %arg3[%c0_4, %c0_5] : memref<32x128xf32, #tpu.memory_space<vmem>>, vector<32x128xf32>
    %cst = arith.constant dense<0.000000e+00> : vector<8x128xf32>
    %6 = tpu.matmul %4, %5, %cst {dimension_numbers = #tpu.dot_dimension_numbers<[1], [0], [0], [1], [0, 0, 1, 1], [], []>} : vector<8x32xf32>, vector<32x128xf32>, vector<8x128xf32> -> vector<8x128xf32>
    %7 = arith.addf %3, %6 : vector<8x128xf32>
    %c0_6 = arith.constant 0 : index
    %c0_7 = arith.constant 0 : index
    %8 = vector.load %arg6[%c0_6, %c0_7] : memref<8x128xf32, #tpu.memory_space<vmem>>, vector<8x128xf32>
    tpu.vector_store %arg6[%c0_6, %c0_7], %7 {strides = array<i32>} : memref<8x128xf32, #tpu.memory_space<vmem>>, vector<8x128xf32>,
    %c0_i32_8 = arith.constant 0 : i32
    %9 = arith.cmpi eq, %arg1, %c0_i32_8 : i32
    %10 = arith.extui %9 : i1 to i32
    %c0_i32_9 = arith.constant 0 : i32
    %11 = arith.cmpi ne, %10, %c0_i32_9 : i32
    scf.if %11 {
      %c0_10 = arith.constant 0 : index
      %c0_11 = arith.constant 0 : index
      %12 = vector.load %arg6[%c0_10, %c0_11] : memref<8x128xf32, #tpu.memory_space<vmem>>, vector<8x128xf32>
      %c0_12 = arith.constant 0 : index
      %c0_13 = arith.constant 0 : index
      %13 = vector.load %arg4[%c0_12, %c0_13] : memref<1x128xf32, #tpu.memory_space<vmem>>, vector<1x128xf32>
      %14 = vector.broadcast %13 : vector<1x128xf32> to vector<8x128xf32>
      %15 = arith.addf %12, %14 : vector<8x128xf32>
      %cst_14 = arith.constant -1.000000e+00 : f32
      %cst_15 = arith.constant 1.000000e+00 : f32
      %16 = vector.broadcast %cst_14 : f32 to vector<8x128xf32>
      %17 = arith.maximumf %16, %15 : vector<8x128xf32>
      %18 = vector.broadcast %cst_15 : f32 to vector<8x128xf32>
      %19 = arith.minimumf %18, %17 : vector<8x128xf32>
      %cst_16 = arith.constant -1.000000e+00 : f32
      %20 = vector.broadcast %cst_16 : f32 to vector<8x128xf32>
      %21 = arith.subf %19, %20 : vector<8x128xf32>
      %cst_17 = arith.constant 8.000000e+00 : f32
      %22 = vector.broadcast %cst_17 : f32 to vector<8x128xf32>
      %23 = arith.mulf %21, %22 : vector<8x128xf32>
      %24 = math.floor %23 : vector<8x128xf32>
      %cst_18 = arith.constant 0.000000e+00 : f32
      %cst_19 = arith.constant 1.500000e+01 : f32
      %25 = vector.broadcast %cst_18 : f32 to vector<8x128xf32>
      %26 = arith.maximumf %25, %24 : vector<8x128xf32>
      %27 = vector.broadcast %cst_19 : f32 to vector<8x128xf32>
      %28 = arith.minimumf %27, %26 : vector<8x128xf32>
      %cst_20 = arith.constant 1.250000e-01 : f32
      %29 = vector.broadcast %cst_20 : f32 to vector<8x128xf32>
      %30 = arith.mulf %28, %29 : vector<8x128xf32>
      %cst_21 = arith.constant -1.000000e+00 : f32
      %31 = vector.broadcast %cst_21 : f32 to vector<8x128xf32>
      %32 = arith.addf %31, %30 : vector<8x128xf32>
      %cst_22 = arith.constant 1.250000e-01 : f32
      %33 = vector.broadcast %cst_22 : f32 to vector<8x128xf32>
      %34 = arith.addf %32, %33 : vector<8x128xf32>
      %35 = arith.subf %19, %32 : vector<8x128xf32>
      %cst_23 = arith.constant 0.000000e+00 : f32
      %36 = vector.broadcast %cst_23 : f32 to vector<8x128xf32>
      %37 = arith.maximumf %35, %36 : vector<8x128xf32>
      %38 = arith.subf %34, %19 : vector<8x128xf32>
      %cst_24 = arith.constant 0.000000e+00 : f32
      %39 = vector.broadcast %cst_24 : f32 to vector<8x128xf32>
      %40 = arith.maximumf %38, %39 : vector<8x128xf32>
      %41 = arith.mulf %37, %40 : vector<8x128xf32>
      %cst_25 = arith.constant 2.560000e+02 : f32
      %42 = vector.broadcast %cst_25 : f32 to vector<8x128xf32>
      %43 = arith.mulf %41, %42 : vector<8x128xf32>
      %44 = arith.mulf %43, %43 : vector<8x128xf32>
      %c0_26 = arith.constant 0 : index
      %c0_27 = arith.constant 0 : index
      %45 = vector.load %arg5[%c0_26, %c0_27] : memref<8x128xf32, #tpu.memory_space<vmem>>, vector<8x128xf32>
      tpu.vector_store %arg5[%c0_26, %c0_27], %44 {strides = array<i32>} : memref<8x128xf32, #tpu.memory_space<vmem>>, vector<8x128xf32>,
    } else {
    }
    return
  }
  func.func @transform_0(%arg0: i32, %arg1: i32) -> (i32, i32) {
    %c0_i32 = arith.constant 0 : i32
    return %arg0, %arg1 : i32, i32
  }
  func.func @transform_1(%arg0: i32, %arg1: i32) -> (i32, i32) {
    %c0_i32 = arith.constant 0 : i32
    %c0_i32_0 = arith.constant 0 : i32
    return %arg1, %c0_i32 : i32, i32
  }
  func.func @transform_2(%arg0: i32, %arg1: i32) -> (i32, i32) {
    %c0_i32 = arith.constant 0 : i32
    %c0_i32_0 = arith.constant 0 : i32
    %c0_i32_1 = arith.constant 0 : i32
    return %c0_i32, %c0_i32_0 : i32, i32
  }
  func.func @transform_3(%arg0: i32, %arg1: i32) -> (i32, i32) {
    %c0_i32 = arith.constant 0 : i32
    %c0_i32_0 = arith.constant 0 : i32
    return %arg0, %c0_i32 : i32, i32
  }
}

</mosaic_0001>

<llo_original>
// kernel: tpu_custom_call.1
$region0: #{tpu_custom_call.1}
  #allocation0 [shape = 'u32[]', space=smem, size = 0x4, offset = 0x4, fixed_abs, tag = 'smem constant byte address 0x4 - core index']
  #allocation1 [shape = 'u32[144,128]{1,0:T(1,128)}', space=vmem, size = 0x12000, scoped, tag = 'internal scratch']
  #allocation2 [shape = 'f32[8,128]{1,0:T(8,128)}', space=vmem, size = 0x1000, scoped, tag = 'scratch operand']
  %s0 = inlined_call_operand.hbm [shape: f32[8,32], index: 0, kind: input, shape index: {}]
  %s1 = inlined_call_operand.hbm [shape: f32[32,128], index: 1, kind: input, shape index: {}]
  %s2 = inlined_call_operand.vmem [shape: f32[1,128], index: 2, kind: input, shape index: {}]
  %s3 = inlined_call_operand.hbm [shape: f32[8,128], index: 3, kind: output, shape index: {}]
  %s4 = sld [smem:[#allocation0]]
  $region38: #{tpu_custom_call.1} parent=0
    _
  %s6 = ssub.s32 1, %s4
  %s7 = scalar_select 0, %s6, %s4
  $region1: #{tpu_custom_call.1} parent=0
    #allocation3 [shape = 'u8[4096]{0}', space=vmem, size = 0x1000, scoped, tag = 'input window, operand 0, single buffered']
    #allocation4 [shape = 's32[1]{0}', space=sflag, size = 0x4, scoped, tag = 'scoped memory for tpu_custom_call.1']
    #allocation5 [shape = 's32[1]{0}', space=sflag, size = 0x4, scoped, tag = 'scoped memory for tpu_custom_call.1']
    #allocation6 [shape = 'u8[16384]{0}', space=vmem, size = 0x4000, scoped, tag = 'input window, operand 1, single buffered']
    #allocation7 [shape = 's32[1]{0}', space=sflag, size = 0x4, scoped, tag = 'scoped memory for tpu_custom_call.1']
    #allocation8 [shape = 'u8[4096]{0}', space=vmem, size = 0x1000, scoped, tag = 'output window, operand 0, single buffered']
    %8 = vsyncpa [#allocation4], 0
    %9 = vsyncpa [#allocation7], 0
    %10 = vsyncpa [#allocation5], 0
    // Predicated region
    $region2: #{tpu_custom_call.1} parent=1 // pred_check
      _
    $region3: #{tpu_custom_call.1} parent=1 // pred_check_branch
      %12 = sbr.rel (0) target = $region5
    $region4: #{tpu_custom_call.1} parent=1 // pred_region
      %s14 = ssub.s32 128, 128
      %15 = vsyncadd [#allocation4], %s14
      %s17 = sshll.u32 [#allocation3], 4
      %s18 = int_to_ptr.vmem [resolvable:$true] %s17
      %20 = dma.hbm_to_vmem [thread:$0]  %s0, 128, %s18, [#allocation4]
    $region5: #{tpu_custom_call.1} parent=1 // pred_fallthru
      _
    // Predicated region
    $region6: #{tpu_custom_call.1} parent=1 // pred_check
      _
    $region7: #{tpu_custom_call.1} parent=1 // pred_check_branch
      %22 = sbr.rel (0) target = $region9
    $region8: #{tpu_custom_call.1} parent=1 // pred_region
      %s24 = ssub.s32 512, 512
      %25 = vsyncadd [#allocation7], %s24
      %s26 = sshll.u32 [#allocation6], 4
      %s27 = int_to_ptr.vmem [resolvable:$true] %s26
      %32 = dma.hbm_to_vmem [thread:$0]  %s1, 512, %s27, [#allocation7], 128, 128, 8
    $region9: #{tpu_custom_call.1} parent=1 // pred_fallthru
      _
    // Predicated region
    $region10: #{tpu_custom_call.1} parent=1 // pred_check
      _
    $region11: #{tpu_custom_call.1} parent=1 // pred_check_branch
      %34 = sbr.rel (0) target = $region13
    $region12: #{tpu_custom_call.1} parent=1 // pred_region
      _
    $region13: #{tpu_custom_call.1} parent=1 // pred_fallthru
      _
    // Predicated region
    $region14: #{tpu_custom_call.1} parent=1 // pred_check
      _
    $region15: #{tpu_custom_call.1} parent=1 // pred_check_branch
      %36 = sbr.rel (0) target = $region17
    $region16: #{tpu_custom_call.1} parent=1 // pred_region
      %37 = dma.done [#allocation4], 128
    $region17: #{tpu_custom_call.1} parent=1 // pred_fallthru
      _
    // Predicated region
    $region18: #{tpu_custom_call.1} parent=1 // pred_check
      _
    $region19: #{tpu_custom_call.1} parent=1 // pred_check_branch
      %39 = sbr.rel (0) target = $region21
    $region20: #{tpu_custom_call.1} parent=1 // pred_region
      %40 = dma.done [#allocation7], 512
    $region21: #{tpu_custom_call.1} parent=1 // pred_fallthru
      _
    %p41 = scmp.eq.s32.totalorder 0, 0
    // Predicated region
    $region22: #{tpu_custom_call.1} parent=1 // pred_check
      %p42 = pneg %p41
    $region23: #{tpu_custom_call.1} parent=1 // pred_check_branch
      %44 = sbr.rel (%p42) target = $region25
    $region24: #{tpu_custom_call.1} parent=1 // pred_region
      %45 = vst [vmem:[#allocation2] sm:$0xff] 0.0
    $region25: #{tpu_custom_call.1} parent=1 // pred_fallthru
      _
    %v46 = vld [vmem:[#allocation2] sm:$0xff]
    %v47 = vld [vmem:[#allocation3] sm:$0xff]
    %v48 = vld [vmem:[#allocation6] sm:$0xff]
    %v49 = vld [vmem:[#allocation6 + $0x8] sm:$0xff]
    %v50 = vld [vmem:[#allocation6 + $0x10] sm:$0xff]
    %v51 = vld [vmem:[#allocation6 + $0x18] sm:$0xff]
    %vm52 = vcmask 261120
    %v54 = vsel %vm52, %v47, 0
    %56 = vmatprep.subr.mxu0 0.0
    %57 = vmatpush1.msra.mxu0 0.0
    %58 = vmatprep.subr.mxu0 0.0
    %59 = vmatpush1.msra.mxu0 0.0
    %60 = vmatprep.subr.mxu0 0.0
    %61 = vmatpush1.msra.mxu0 0.0
    %62 = vmatprep.subr.mxu0 0.0
    %63 = vmatpush1.msra.mxu0 0.0
    %64 = vmatprep.subr.mxu0 0.0
    %65 = vmatpush1.msra.mxu0 0.0
    %66 = vmatprep.subr.mxu0 0.0
    %67 = vmatpush1.msra.mxu0 0.0
    %68 = vmatprep.subr.mxu0 0.0
    %69 = vmatpush1.msra.mxu0 0.0
    %70 = vmatprep.subr.mxu0 0.0
    %71 = vmatpush1.msra.mxu0 0.0
    %72 = vmatprep.subr.mxu0 0.0
    %73 = vmatpush1.msra.mxu0 0.0
    %74 = vmatprep.subr.mxu0 0.0
    %75 = vmatpush1.msra.mxu0 0.0
    %76 = vmatprep.subr.mxu0 0.0
    %77 = vmatpush1.msra.mxu0 0.0
    %78 = vmatprep.subr.mxu0 0.0
    %79 = vmatpush1.msra.mxu0 0.0
    %80 = vmatprep.subr.mxu0 0.0
    %81 = vmatpush1.msra.mxu0 %v51
    %82 = vmatprep.subr.mxu0 0.0
    %83 = vmatpush1.msra.mxu0 %v50
    %84 = vmatprep.subr.mxu0 0.0
    %85 = vmatpush1.msra.mxu0 %v49
    %86 = vmatprep.subr.mxu0 0.0
    %87 = vmatpush1.msra.mxu0 %v48
    %88 = vmatprep.subr.mxu0 0.0
    %89 = vmatpush2.msra.mxu0 0.0
    %90 = vmatprep.subr.mxu0 0.0
    %91 = vmatpush2.msra.mxu0 0.0
    %92 = vmatprep.subr.mxu0 0.0
    %93 = vmatpush2.msra.mxu0 0.0
    %94 = vmatprep.subr.mxu0 0.0
    %95 = vmatpush2.msra.mxu0 0.0
    %96 = vmatprep.subr.mxu0 0.0
    %97 = vmatpush2.msra.mxu0 0.0
    %98 = vmatprep.subr.mxu0 0.0
    %99 = vmatpush2.msra.mxu0 0.0
    %100 = vmatprep.subr.mxu0 0.0
    %101 = vmatpush2.msra.mxu0 0.0
    %102 = vmatprep.subr.mxu0 0.0
    %103 = vmatpush2.msra.mxu0 0.0
    %104 = vmatprep.subr.mxu0 0.0
    %105 = vmatpush2.msra.mxu0 0.0
    %106 = vmatprep.subr.mxu0 0.0
    %107 = vmatpush2.msra.mxu0 0.0
    %108 = vmatprep.subr.mxu0 0.0
    %109 = vmatpush2.msra.mxu0 0.0
    %110 = vmatprep.subr.mxu0 0.0
    %111 = vmatpush2.msra.mxu0 0.0
    %112 = vmatprep.subr.mxu0 0.0
    %113 = vmatpush2.msra.mxu0 0.0
    %114 = vmatprep.subr.mxu0 0.0
    %115 = vmatpush2.msra.mxu0 0.0
    %116 = vmatprep.subr.mxu0 0.0
    %117 = vmatpush2.msra.mxu0 0.0
    %118 = vmatprep.subr.mxu0 0.0
    %119 = vmatpush2.msra.mxu0 0.0
    %120 = vmatprep.mubr.f32.mxu0 0.0
    %121 = vmatmul.mubr.f32.gmra.mxu0 %v54
    %v122 = vpop.f32.mrf.mxu0
    %v123 = vadd.f32 0.0, %v122
    %v124 = vpop.f32.mrf.mxu0
    %125 = vdwg.mxu0
    %v126 = vadd.f32 %v46, %v123
    %127 = vst [vmem:[#allocation2] sm:$0xff] %v126
    // Predicated region
    $region26: #{tpu_custom_call.1} parent=1 // pred_check
      %p128 = pneg %p41
    $region27: #{tpu_custom_call.1} parent=1 // pred_check_branch
      %130 = sbr.rel (%p128) target = $region29
    $region28: #{tpu_custom_call.1} parent=1 // pred_region
      %v131 = vld [vmem:[#allocation2] sm:$0xff]
      %v132 = vld [vmem:[%s2] sm:$0x1]
      %v134 = vlaneseq
      %v135 = vshrl.u32 %v134, 7
      %v136 = vsub.s32 0, %v135
      %v137 = vrot.slane %v132, %v136
      %v139 = vadd.f32 %v131, %v137
      %v140 = vmax.f32 %v139, -1.0
      %v141 = vmin.f32 %v140, 1.0
      %v142 = vsub.f32 %v141, -1.0
      %v143 = vmul.f32 %v142, 8.0
      %v144 = vfloor.f32 %v143
      %v145 = vmax.f32 %v144, 0.0
      %v146 = vmin.f32 %v145, 15.0
      %v147 = vmul.f32 %v146, 0.125
      %v148 = vadd.f32 %v147, -1.0
      %v149 = vadd.f32 %v148, 0.125
      %v150 = vsub.f32 %v141, %v148
      %v151 = vmax.f32 %v150, 0.0
      %v152 = vsub.f32 %v149, %v141
      %v153 = vmax.f32 %v152, 0.0
      %v154 = vmul.f32 %v151, %v153
      %v155 = vmul.f32 %v154, 256.0
      %v156 = vmul.f32 %v155, %v155
      %157 = vst [vmem:[#allocation8] sm:$0xff] %v156
    $region29: #{tpu_custom_call.1} parent=1 // pred_fallthru
      _
    // Predicated region
    $region30: #{tpu_custom_call.1} parent=1 // pred_check
      _
    $region31: #{tpu_custom_call.1} parent=1 // pred_check_branch
      %159 = sbr.rel (0) target = $region33
    $region32: #{tpu_custom_call.1} parent=1 // pred_region
      %s161 = ssub.s32 128, 128
      %162 = vsyncadd [#allocation5], %s161
      %s164 = sshll.u32 [#allocation8], 4
      %s165 = int_to_ptr.vmem [resolvable:$true] %s164
      %167 = dma.vmem_to_hbm [thread:$0]  %s165, 128, %s3, [#allocation5]
    $region33: #{tpu_custom_call.1} parent=1 // pred_fallthru
      _
    // Predicated region
    $region34: #{tpu_custom_call.1} parent=1 // pred_check
      _
    $region35: #{tpu_custom_call.1} parent=1 // pred_check_branch
      %169 = sbr.rel (0) target = $region37
    $region36: #{tpu_custom_call.1} parent=1 // pred_region
      %170 = dma.done [#allocation5], 128
    $region37: #{tpu_custom_call.1} parent=1 // pred_fallthru
      _
    %171 = vsyncpa [#allocation4], 1
    %172 = vsyncpa [#allocation7], 1
    %173 = vsyncpa [#allocation5], 1

</llo_original>
